<compile_context>
chip_gen: v6e
topology: v6e:2x2x1
jax: 0.10.0
libtpu: 0.0.40
codegen_flags: <defaults>
</compile_context>

<pallas_src>
import jax
import jax.numpy as jnp
import numpy as np
from jax.experimental import pallas as pl
from jax.experimental.pallas import tpu as pltpu  # noqa: F401  (kept for parity / future scratch use)


def _lstm_kernel(x_ref, params_ref, out_ref):
    """Multi-layer LSTM, hidden_size = 1, wavefront register-resident recurrence.

    x_ref      : (seq, input_size)              f32
    params_ref : (input_size + 3*n_layers, 4)   f32, rows =
                   [0, in)              : layer-0 input weights, pre-transposed
                   [in, in+L)           : input weights of layers >= 1 (row 0 unused)
                   [in+L, in+2L)        : recurrent weights (hidden dim squeezed)
                   [in+2L, in+3L)       : b_ih + b_hh per layer
                 gate order (i, f, g, o); the 'g' column is pre-scaled by 2.
    out_ref    : (1, seq + 2*n_layers)  lane-major packed [output | hn | cn]
    """
    seq, in_size = x_ref.shape
    n_layers = (params_ref.shape[0] - in_size) // 3
    total = seq + 2 * n_layers

    x = x_ref[...]                                     # (seq, in)
    p = params_ref[...]                                # (in + 3L, 4)
    wih0t = p[0:in_size, :]                            # (in, 4)
    wihr = p[in_size:in_size + n_layers, :]            # (L, 4) row 0 unused
    whh = p[in_size + n_layers:in_size + 2 * n_layers, :]        # (L, 4)
    bias = p[in_size + 2 * n_layers:in_size + 3 * n_layers, :]   # (L, 4)

    # Layer-0 input projection: tree-structured VPU broadcast FMAs (no MXU).
    terms = [x[:, k:k + 1] * wih0t[k:k + 1, :] for k in range(in_size)]
    terms.append(bias[0:1, :])                         # broadcasts in the add
    while len(terms) > 1:
        nxt = [terms[i] + terms[i + 1] for i in range(0, len(terms) - 1, 2)]
        if len(terms) % 2:
            nxt.append(terms[-1])
        terms = nxt
    gx0 = terms[0]                                     # (seq, 4), includes layer-0 bias

    zero1 = jnp.zeros((1, 1), jnp.float32)
    zero4 = jnp.zeros((1, 4), jnp.float32)
    c = [zero1] * n_layers                             # cell state per layer
    rec = [zero4] * n_layers                           # h_{l,t-1} * whh[l] (recurrent contrib)
    h_last = [zero1] * n_layers                        # final hidden per layer
    out_h = []                                         # last-layer hidden per step

    xc = zero4                                         # cross-layer contrib for layer l at step t
    # Wavefront over (t, l): layer l step t depends only on layer l step t-1
    # and layer l-1 step t; the fully unrolled trace exposes that DAG.
    for t in range(seq):
        for l in range(n_layers):
            inp = gx0[t:t + 1, :] if l == 0 else xc
            g = inp + rec[l]                           # (1,4) pre-activations (g lane x2)
            s = jax.nn.sigmoid(g)                      # ONE fused 4-lane EUP push
            i_g = s[:, 0:1]
            f_g = s[:, 1:2]
            s_g = s[:, 2:3]
            o_g = s[:, 3:4]
            c[l] = f_g * c[l] + i_g * (2.0 * s_g - 1.0)   # tanh(z) = 2*sigmoid(2z) - 1
            ow = o_g * whh[l:l + 1, :]                 # overlaps the tanh EUP latency
            if l + 1 < n_layers:
                owx = o_g * wihr[l + 1:l + 2, :]       # ditto, for the cross-layer path
            tc = jnp.tanh(c[l])                        # EUP push #2
            h = o_g * tc                               # off the recurrent chain
            rec[l] = ow * tc                           # one mul after tanh on the chain
            if l + 1 < n_layers:
                xc = owx * tc + bias[l + 1:l + 2, :]   # input contrib for layer l+1, step t
            h_last[l] = h
            if l == n_layers - 1:
                out_h.append(h)

    # Assemble the packed lane-major output row and write it once.
    lane = jax.lax.broadcasted_iota(jnp.int32, (1, total), 1)
    row = jnp.zeros((1, total), jnp.float32)
    for t in range(seq):
        row = jnp.where(lane == t, out_h[t], row)
    for l in range(n_layers):
        row = jnp.where(lane == seq + l, h_last[l], row)
        row = jnp.where(lane == seq + n_layers + l, c[l], row)
    out_ref[...] = row


def pack_params(wih_list, whh_list, bih_list, bhh_list):
    """Pack torch-layout LSTM params (gate order i,f,g,o) into one array for the
    kernel; the 'g' gate column is pre-scaled by 2 so tanh can be recovered from
    a single fused sigmoid."""
    n_layers = len(wih_list)
    assert n_layers >= 1, "need at least one LSTM layer"
    for l in range(1, n_layers):
        assert wih_list[l].shape == (4, 1), "layers >= 1 must have input size 1 (hidden_size=1)"
    gscale = jnp.array([1.0, 1.0, 2.0, 1.0], jnp.float32)[None, :]

    wih0_t = (wih_list[0].T * gscale).astype(jnp.float32)                 # (in, 4)
    wihr_rows = [jnp.zeros((4,), jnp.float32)]                            # row 0 unused
    wihr_rows += [wih_list[l][:, 0] for l in range(1, n_layers)]
    wihr = (jnp.stack(wihr_rows) * gscale).astype(jnp.float32)            # (L, 4)
    whh = (jnp.stack([whh_list[l][:, 0] for l in range(n_layers)])
           * gscale).astype(jnp.float32)                                  # (L, 4)
    bias = (jnp.stack([bih_list[l] + bhh_list[l] for l in range(n_layers)])
            * gscale).astype(jnp.float32)                                 # (L, 4)
    return jnp.concatenate([wih0_t, wihr, whh, bias], axis=0)             # (in + 3L, 4)


def lstm_forward(x, params):
    seq, in_size = x.shape
    n_layers = (params.shape[0] - in_size) // 3
    total = seq + 2 * n_layers

    packed = pl.pallas_call(
        _lstm_kernel,
        out_shape=jax.ShapeDtypeStruct((1, total), jnp.float32),
        grid=(1,),
        in_specs=[
            pl.BlockSpec((seq, in_size), lambda i: (0, 0)),
            pl.BlockSpec(params.shape, lambda i: (0, 0)),
        ],
        out_specs=pl.BlockSpec((1, total), lambda i: (0, 0)),
    )(x, params)

    out = packed[0, :seq].reshape(seq, 1)
    hn = packed[0, seq:seq + n_layers].reshape(n_layers, 1)
    cn = packed[0, seq + n_layers:total].reshape(n_layers, 1)
    return out, hn, cn


def lstm_ref(x, wih_list, whh_list, bih_list, bhh_list):
    """Pure-JAX reference with torch nn.LSTM semantics (hidden_size=1)."""
    seq = x.shape[0]
    n_layers = len(wih_list)
    inp = x
    hn, cn = [], []
    for l in range(n_layers):
        W_ih = wih_list[l]                    # (4, in_l)
        W_hh = whh_list[l]                    # (4, 1)
        b = bih_list[l] + bhh_list[l]         # (4,)
        h = jnp.zeros((1,), jnp.float32)
        c = jnp.zeros((1,), jnp.float32)
        outs = []
        for t in range(seq):
            g = W_ih @ inp[t] + W_hh @ h + b
            i = jax.nn.sigmoid(g[0])
            f = jax.nn.sigmoid(g[1])
            gg = jnp.tanh(g[2])
            o = jax.nn.sigmoid(g[3])
            c = f * c + i * gg
            h = o * jnp.tanh(c)
            outs.append(h)
        inp = jnp.stack(outs)                 # (seq, 1)
        hn.append(h)
        cn.append(c)
    return inp, jnp.stack(hn), jnp.stack(cn)


if __name__ == "__main__":
    # Module hyperparameters: LSTM(input_size=4, n_layers=2, window_size=8)
    input_size = 4
    n_layers = 2
    window_size = 8  # seq_len of the forward pass

    key = jax.random.PRNGKey(0)
    keys = jax.random.split(key, 1 + 4 * n_layers)
    x = jax.random.normal(keys[0], (window_size, input_size), dtype=jnp.float32)

    # Deterministic per-layer parameters (torch layout: gate order i, f, g, o).
    wih_list, whh_list, bih_list, bhh_list = [], [], [], []
    for l in range(n_layers):
        in_l = input_size if l == 0 else 1
        k_w = keys[1 + 4 * l: 1 + 4 * (l + 1)]
        wih_list.append(jax.random.uniform(k_w[0], (4, in_l), jnp.float32, -0.5, 0.5))
        whh_list.append(jax.random.uniform(k_w[1], (4, 1), jnp.float32, -0.5, 0.5))
        bih_list.append(jax.random.uniform(k_w[2], (4,), jnp.float32, -0.5, 0.5))
        bhh_list.append(jax.random.uniform(k_w[3], (4,), jnp.float32, -0.5, 0.5))

    params = pack_params(wih_list, whh_list, bih_list, bhh_list)

    out, hn, cn = lstm_forward(x, params)
    jax.block_until_ready((out, hn, cn))

    out_r, hn_r, cn_r = lstm_ref(x, wih_list, whh_list, bih_list, bhh_list)
    assert np.allclose(np.asarray(out), np.asarray(out_r), rtol=1e-5, atol=1e-5)
    assert np.allclose(np.asarray(hn), np.asarray(hn_r), rtol=1e-5, atol=1e-5)
    assert np.allclose(np.asarray(cn), np.asarray(cn_r), rtol=1e-5, atol=1e-5)

    print("KERNEL_OK")
</pallas_src>

<mosaic_0001>
module attributes {stable_mosaic.version = 11 : i64} {
  func.func @_lstm_kernel(%arg0: i32, %arg1: memref<8x4xf32, #tpu.memory_space<vmem>>, %arg2: memref<10x4xf32, #tpu.memory_space<vmem>>, %arg3: memref<1x12xf32, #tpu.memory_space<vmem>>) attributes {dimension_semantics = [#tpu.dimension_semantics<arbitrary>], iteration_bounds = array<i64: 1>, scalar_prefetch = 0 : i64, scratch_operands = 0 : i64, tpu.core_type = #tpu.core_type<tc>, window_params = [{pipeline_mode = #tpu.pipeline_mode<synchronous>, transform_indices = @transform_0, window_bounds = array<i64: 8, 4>}, {pipeline_mode = #tpu.pipeline_mode<synchronous>, transform_indices = @transform_1, window_bounds = array<i64: 10, 4>}, {pipeline_mode = #tpu.pipeline_mode<synchronous>, transform_indices = @transform_2, window_bounds = array<i64: 1, 12>}]} {
    %c0 = arith.constant 0 : index
    %c0_0 = arith.constant 0 : index
    %0 = vector.load %arg1[%c0, %c0_0] : memref<8x4xf32, #tpu.memory_space<vmem>>, vector<8x4xf32>
    %c0_1 = arith.constant 0 : index
    %c0_2 = arith.constant 0 : index
    %1 = vector.load %arg2[%c0_1, %c0_2] : memref<10x4xf32, #tpu.memory_space<vmem>>, vector<10x4xf32>
    %2 = vector.extract_strided_slice %1 {offsets = [0, 0], sizes = [4, 4], strides = [1, 1]} : vector<10x4xf32> to vector<4x4xf32>
    %3 = vector.extract_strided_slice %1 {offsets = [4, 0], sizes = [2, 4], strides = [1, 1]} : vector<10x4xf32> to vector<2x4xf32>
    %4 = vector.extract_strided_slice %1 {offsets = [6, 0], sizes = [2, 4], strides = [1, 1]} : vector<10x4xf32> to vector<2x4xf32>
    %5 = vector.extract_strided_slice %1 {offsets = [8, 0], sizes = [2, 4], strides = [1, 1]} : vector<10x4xf32> to vector<2x4xf32>
    %6 = vector.extract_strided_slice %0 {offsets = [0, 0], sizes = [8, 1], strides = [1, 1]} : vector<8x4xf32> to vector<8x1xf32>
    %7 = vector.extract_strided_slice %2 {offsets = [0, 0], sizes = [1, 4], strides = [1, 1]} : vector<4x4xf32> to vector<1x4xf32>
    %8 = vector.broadcast %6 : vector<8x1xf32> to vector<8x4xf32>
    %9 = vector.broadcast %7 : vector<1x4xf32> to vector<8x4xf32>
    %10 = arith.mulf %8, %9 : vector<8x4xf32>
    %11 = vector.extract_strided_slice %0 {offsets = [0, 1], sizes = [8, 1], strides = [1, 1]} : vector<8x4xf32> to vector<8x1xf32>
    %12 = vector.extract_strided_slice %2 {offsets = [1, 0], sizes = [1, 4], strides = [1, 1]} : vector<4x4xf32> to vector<1x4xf32>
    %13 = vector.broadcast %11 : vector<8x1xf32> to vector<8x4xf32>
    %14 = vector.broadcast %12 : vector<1x4xf32> to vector<8x4xf32>
    %15 = arith.mulf %13, %14 : vector<8x4xf32>
    %16 = vector.extract_strided_slice %0 {offsets = [0, 2], sizes = [8, 1], strides = [1, 1]} : vector<8x4xf32> to vector<8x1xf32>
    %17 = vector.extract_strided_slice %2 {offsets = [2, 0], sizes = [1, 4], strides = [1, 1]} : vector<4x4xf32> to vector<1x4xf32>
    %18 = vector.broadcast %16 : vector<8x1xf32> to vector<8x4xf32>
    %19 = vector.broadcast %17 : vector<1x4xf32> to vector<8x4xf32>
    %20 = arith.mulf %18, %19 : vector<8x4xf32>
    %21 = vector.extract_strided_slice %0 {offsets = [0, 3], sizes = [8, 1], strides = [1, 1]} : vector<8x4xf32> to vector<8x1xf32>
    %22 = vector.extract_strided_slice %2 {offsets = [3, 0], sizes = [1, 4], strides = [1, 1]} : vector<4x4xf32> to vector<1x4xf32>
    %23 = vector.broadcast %21 : vector<8x1xf32> to vector<8x4xf32>
    %24 = vector.broadcast %22 : vector<1x4xf32> to vector<8x4xf32>
    %25 = arith.mulf %23, %24 : vector<8x4xf32>
    %26 = vector.extract_strided_slice %5 {offsets = [0, 0], sizes = [1, 4], strides = [1, 1]} : vector<2x4xf32> to vector<1x4xf32>
    %27 = arith.addf %10, %15 : vector<8x4xf32>
    %28 = arith.addf %20, %25 : vector<8x4xf32>
    %29 = arith.addf %27, %28 : vector<8x4xf32>
    %30 = vector.broadcast %26 : vector<1x4xf32> to vector<8x4xf32>
    %31 = arith.addf %29, %30 : vector<8x4xf32>
    %cst = arith.constant 0.000000e+00 : f32
    %32 = vector.broadcast %cst : f32 to vector<1x1xf32>
    %cst_3 = arith.constant 0.000000e+00 : f32
    %33 = vector.broadcast %cst_3 : f32 to vector<1x4xf32>
    %34 = vector.extract_strided_slice %31 {offsets = [0, 0], sizes = [1, 4], strides = [1, 1]} : vector<8x4xf32> to vector<1x4xf32>
    %35 = arith.addf %34, %33 : vector<1x4xf32>
    %36 = arith.negf %35 : vector<1x4xf32>
    %37 = math.exp %36 : vector<1x4xf32>
    %cst_4 = arith.constant 1.000000e+00 : f32
    %38 = vector.broadcast %cst_4 : f32 to vector<1x4xf32>
    %39 = arith.addf %38, %37 : vector<1x4xf32>
    %40 = arith.divf %38, %39 : vector<1x4xf32>
    %41 = vector.extract_strided_slice %40 {offsets = [0, 0], sizes = [1, 1], strides = [1, 1]} : vector<1x4xf32> to vector<1x1xf32>
    %42 = vector.extract_strided_slice %40 {offsets = [0, 1], sizes = [1, 1], strides = [1, 1]} : vector<1x4xf32> to vector<1x1xf32>
    %43 = vector.extract_strided_slice %40 {offsets = [0, 2], sizes = [1, 1], strides = [1, 1]} : vector<1x4xf32> to vector<1x1xf32>
    %44 = vector.extract_strided_slice %40 {offsets = [0, 3], sizes = [1, 1], strides = [1, 1]} : vector<1x4xf32> to vector<1x1xf32>
    %45 = arith.mulf %42, %32 : vector<1x1xf32>
    %cst_5 = arith.constant 2.000000e+00 : f32
    %46 = vector.broadcast %cst_5 : f32 to vector<1x1xf32>
    %47 = arith.mulf %46, %43 : vector<1x1xf32>
    %cst_6 = arith.constant 1.000000e+00 : f32
    %48 = vector.broadcast %cst_6 : f32 to vector<1x1xf32>
    %49 = arith.subf %47, %48 : vector<1x1xf32>
    %50 = arith.mulf %41, %49 : vector<1x1xf32>
    %51 = arith.addf %45, %50 : vector<1x1xf32>
    %52 = vector.extract_strided_slice %4 {offsets = [0, 0], sizes = [1, 4], strides = [1, 1]} : vector<2x4xf32> to vector<1x4xf32>
    %53 = vector.broadcast %44 : vector<1x1xf32> to vector<1x4xf32>
    %54 = arith.mulf %53, %52 : vector<1x4xf32>
    %55 = vector.extract_strided_slice %3 {offsets = [1, 0], sizes = [1, 4], strides = [1, 1]} : vector<2x4xf32> to vector<1x4xf32>
    %56 = vector.broadcast %44 : vector<1x1xf32> to vector<1x4xf32>
    %57 = arith.mulf %56, %55 : vector<1x4xf32>
    %58 = math.tanh %51 : vector<1x1xf32>
    %59 = vector.broadcast %58 : vector<1x1xf32> to vector<1x4xf32>
    %60 = arith.mulf %54, %59 : vector<1x4xf32>
    %61 = vector.broadcast %58 : vector<1x1xf32> to vector<1x4xf32>
    %62 = arith.mulf %57, %61 : vector<1x4xf32>
    %63 = vector.extract_strided_slice %5 {offsets = [1, 0], sizes = [1, 4], strides = [1, 1]} : vector<2x4xf32> to vector<1x4xf32>
    %64 = arith.addf %62, %63 : vector<1x4xf32>
    %65 = arith.addf %64, %33 : vector<1x4xf32>
    %66 = arith.negf %65 : vector<1x4xf32>
    %67 = math.exp %66 : vector<1x4xf32>
    %cst_7 = arith.constant 1.000000e+00 : f32
    %68 = vector.broadcast %cst_7 : f32 to vector<1x4xf32>
    %69 = arith.addf %68, %67 : vector<1x4xf32>
    %70 = arith.divf %68, %69 : vector<1x4xf32>
    %71 = vector.extract_strided_slice %70 {offsets = [0, 0], sizes = [1, 1], strides = [1, 1]} : vector<1x4xf32> to vector<1x1xf32>
    %72 = vector.extract_strided_slice %70 {offsets = [0, 1], sizes = [1, 1], strides = [1, 1]} : vector<1x4xf32> to vector<1x1xf32>
    %73 = vector.extract_strided_slice %70 {offsets = [0, 2], sizes = [1, 1], strides = [1, 1]} : vector<1x4xf32> to vector<1x1xf32>
    %74 = vector.extract_strided_slice %70 {offsets = [0, 3], sizes = [1, 1], strides = [1, 1]} : vector<1x4xf32> to vector<1x1xf32>
    %75 = arith.mulf %72, %32 : vector<1x1xf32>
    %cst_8 = arith.constant 2.000000e+00 : f32
    %76 = vector.broadcast %cst_8 : f32 to vector<1x1xf32>
    %77 = arith.mulf %76, %73 : vector<1x1xf32>
    %cst_9 = arith.constant 1.000000e+00 : f32
    %78 = vector.broadcast %cst_9 : f32 to vector<1x1xf32>
    %79 = arith.subf %77, %78 : vector<1x1xf32>
    %80 = arith.mulf %71, %79 : vector<1x1xf32>
    %81 = arith.addf %75, %80 : vector<1x1xf32>
    %82 = vector.extract_strided_slice %4 {offsets = [1, 0], sizes = [1, 4], strides = [1, 1]} : vector<2x4xf32> to vector<1x4xf32>
    %83 = vector.broadcast %74 : vector<1x1xf32> to vector<1x4xf32>
    %84 = arith.mulf %83, %82 : vector<1x4xf32>
    %85 = math.tanh %81 : vector<1x1xf32>
    %86 = arith.mulf %74, %85 : vector<1x1xf32>
    %87 = vector.broadcast %85 : vector<1x1xf32> to vector<1x4xf32>
    %88 = arith.mulf %84, %87 : vector<1x4xf32>
    %89 = vector.extract_strided_slice %31 {offsets = [1, 0], sizes = [1, 4], strides = [1, 1]} : vector<8x4xf32> to vector<1x4xf32>
    %90 = arith.addf %89, %60 : vector<1x4xf32>
    %91 = arith.negf %90 : vector<1x4xf32>
    %92 = math.exp %91 : vector<1x4xf32>
    %cst_10 = arith.constant 1.000000e+00 : f32
    %93 = vector.broadcast %cst_10 : f32 to vector<1x4xf32>
    %94 = arith.addf %93, %92 : vector<1x4xf32>
    %95 = arith.divf %93, %94 : vector<1x4xf32>
    %96 = vector.extract_strided_slice %95 {offsets = [0, 0], sizes = [1, 1], strides = [1, 1]} : vector<1x4xf32> to vector<1x1xf32>
    %97 = vector.extract_strided_slice %95 {offsets = [0, 1], sizes = [1, 1], strides = [1, 1]} : vector<1x4xf32> to vector<1x1xf32>
    %98 = vector.extract_strided_slice %95 {offsets = [0, 2], sizes = [1, 1], strides = [1, 1]} : vector<1x4xf32> to vector<1x1xf32>
    %99 = vector.extract_strided_slice %95 {offsets = [0, 3], sizes = [1, 1], strides = [1, 1]} : vector<1x4xf32> to vector<1x1xf32>
    %100 = arith.mulf %97, %51 : vector<1x1xf32>
    %cst_11 = arith.constant 2.000000e+00 : f32
    %101 = vector.broadcast %cst_11 : f32 to vector<1x1xf32>
    %102 = arith.mulf %101, %98 : vector<1x1xf32>
    %cst_12 = arith.constant 1.000000e+00 : f32
    %103 = vector.broadcast %cst_12 : f32 to vector<1x1xf32>
    %104 = arith.subf %102, %103 : vector<1x1xf32>
    %105 = arith.mulf %96, %104 : vector<1x1xf32>
    %106 = arith.addf %100, %105 : vector<1x1xf32>
    %107 = vector.extract_strided_slice %4 {offsets = [0, 0], sizes = [1, 4], strides = [1, 1]} : vector<2x4xf32> to vector<1x4xf32>
    %108 = vector.broadcast %99 : vector<1x1xf32> to vector<1x4xf32>
    %109 = arith.mulf %108, %107 : vector<1x4xf32>
    %110 = vector.extract_strided_slice %3 {offsets = [1, 0], sizes = [1, 4], strides = [1, 1]} : vector<2x4xf32> to vector<1x4xf32>
    %111 = vector.broadcast %99 : vector<1x1xf32> to vector<1x4xf32>
    %112 = arith.mulf %111, %110 : vector<1x4xf32>
    %113 = math.tanh %106 : vector<1x1xf32>
    %114 = vector.broadcast %113 : vector<1x1xf32> to vector<1x4xf32>
    %115 = arith.mulf %109, %114 : vector<1x4xf32>
    %116 = vector.broadcast %113 : vector<1x1xf32> to vector<1x4xf32>
    %117 = arith.mulf %112, %116 : vector<1x4xf32>
    %118 = vector.extract_strided_slice %5 {offsets = [1, 0], sizes = [1, 4], strides = [1, 1]} : vector<2x4xf32> to vector<1x4xf32>
    %119 = arith.addf %117, %118 : vector<1x4xf32>
    %120 = arith.addf %119, %88 : vector<1x4xf32>
    %121 = arith.negf %120 : vector<1x4xf32>
    %122 = math.exp %121 : vector<1x4xf32>
    %cst_13 = arith.constant 1.000000e+00 : f32
    %123 = vector.broadcast %cst_13 : f32 to vector<1x4xf32>
    %124 = arith.addf %123, %122 : vector<1x4xf32>
    %125 = arith.divf %123, %124 : vector<1x4xf32>
    %126 = vector.extract_strided_slice %125 {offsets = [0, 0], sizes = [1, 1], strides = [1, 1]} : vector<1x4xf32> to vector<1x1xf32>
    %127 = vector.extract_strided_slice %125 {offsets = [0, 1], sizes = [1, 1], strides = [1, 1]} : vector<1x4xf32> to vector<1x1xf32>
    %128 = vector.extract_strided_slice %125 {offsets = [0, 2], sizes = [1, 1], strides = [1, 1]} : vector<1x4xf32> to vector<1x1xf32>
    %129 = vector.extract_strided_slice %125 {offsets = [0, 3], sizes = [1, 1], strides = [1, 1]} : vector<1x4xf32> to vector<1x1xf32>
    %130 = arith.mulf %127, %81 : vector<1x1xf32>
    %cst_14 = arith.constant 2.000000e+00 : f32
    %131 = vector.broadcast %cst_14 : f32 to vector<1x1xf32>
    %132 = arith.mulf %131, %128 : vector<1x1xf32>
    %cst_15 = arith.constant 1.000000e+00 : f32
    %133 = vector.broadcast %cst_15 : f32 to vector<1x1xf32>
    %134 = arith.subf %132, %133 : vector<1x1xf32>
    %135 = arith.mulf %126, %134 : vector<1x1xf32>
    %136 = arith.addf %130, %135 : vector<1x1xf32>
    %137 = vector.extract_strided_slice %4 {offsets = [1, 0], sizes = [1, 4], strides = [1, 1]} : vector<2x4xf32> to vector<1x4xf32>
    %138 = vector.broadcast %129 : vector<1x1xf32> to vector<1x4xf32>
    %139 = arith.mulf %138, %137 : vector<1x4xf32>
    %140 = math.tanh %136 : vector<1x1xf32>
    %141 = arith.mulf %129, %140 : vector<1x1xf32>
    %142 = vector.broadcast %140 : vector<1x1xf32> to vector<1x4xf32>
    %143 = arith.mulf %139, %142 : vector<1x4xf32>
    %144 = vector.extract_strided_slice %31 {offsets = [2, 0], sizes = [1, 4], strides = [1, 1]} : vector<8x4xf32> to vector<1x4xf32>
    %145 = arith.addf %144, %115 : vector<1x4xf32>
    %146 = arith.negf %145 : vector<1x4xf32>
    %147 = math.exp %146 : vector<1x4xf32>
    %cst_16 = arith.constant 1.000000e+00 : f32
    %148 = vector.broadcast %cst_16 : f32 to vector<1x4xf32>
    %149 = arith.addf %148, %147 : vector<1x4xf32>
    %150 = arith.divf %148, %149 : vector<1x4xf32>
    %151 = vector.extract_strided_slice %150 {offsets = [0, 0], sizes = [1, 1], strides = [1, 1]} : vector<1x4xf32> to vector<1x1xf32>
    %152 = vector.extract_strided_slice %150 {offsets = [0, 1], sizes = [1, 1], strides = [1, 1]} : vector<1x4xf32> to vector<1x1xf32>
    %153 = vector.extract_strided_slice %150 {offsets = [0, 2], sizes = [1, 1], strides = [1, 1]} : vector<1x4xf32> to vector<1x1xf32>
    %154 = vector.extract_strided_slice %150 {offsets = [0, 3], sizes = [1, 1], strides = [1, 1]} : vector<1x4xf32> to vector<1x1xf32>
    %155 = arith.mulf %152, %106 : vector<1x1xf32>
    %cst_17 = arith.constant 2.000000e+00 : f32
    %156 = vector.broadcast %cst_17 : f32 to vector<1x1xf32>
    %157 = arith.mulf %156, %153 : vector<1x1xf32>
    %cst_18 = arith.constant 1.000000e+00 : f32
    %158 = vector.broadcast %cst_18 : f32 to vector<1x1xf32>
    %159 = arith.subf %157, %158 : vector<1x1xf32>
    %160 = arith.mulf %151, %159 : vector<1x1xf32>
    %161 = arith.addf %155, %160 : vector<1x1xf32>
    %162 = vector.extract_strided_slice %4 {offsets = [0, 0], sizes = [1, 4], strides = [1, 1]} : vector<2x4xf32> to vector<1x4xf32>
    %163 = vector.broadcast %154 : vector<1x1xf32> to vector<1x4xf32>
    %164 = arith.mulf %163, %162 : vector<1x4xf32>
    %165 = vector.extract_strided_slice %3 {offsets = [1, 0], sizes = [1, 4], strides = [1, 1]} : vector<2x4xf32> to vector<1x4xf32>
    %166 = vector.broadcast %154 : vector<1x1xf32> to vector<1x4xf32>
    %167 = arith.mulf %166, %165 : vector<1x4xf32>
    %168 = math.tanh %161 : vector<1x1xf32>
    %169 = vector.broadcast %168 : vector<1x1xf32> to vector<1x4xf32>
    %170 = arith.mulf %164, %169 : vector<1x4xf32>
    %171 = vector.broadcast %168 : vector<1x1xf32> to vector<1x4xf32>
    %172 = arith.mulf %167, %171 : vector<1x4xf32>
    %173 = vector.extract_strided_slice %5 {offsets = [1, 0], sizes = [1, 4], strides = [1, 1]} : vector<2x4xf32> to vector<1x4xf32>
    %174 = arith.addf %172, %173 : vector<1x4xf32>
    %175 = arith.addf %174, %143 : vector<1x4xf32>
    %176 = arith.negf %175 : vector<1x4xf32>
    %177 = math.exp %176 : vector<1x4xf32>
    %cst_19 = arith.constant 1.000000e+00 : f32
    %178 = vector.broadcast %cst_19 : f32 to vector<1x4xf32>
    %179 = arith.addf %178, %177 : vector<1x4xf32>
    %180 = arith.divf %178, %179 : vector<1x4xf32>
    %181 = vector.extract_strided_slice %180 {offsets = [0, 0], sizes = [1, 1], strides = [1, 1]} : vector<1x4xf32> to vector<1x1xf32>
    %182 = vector.extract_strided_slice %180 {offsets = [0, 1], sizes = [1, 1], strides = [1, 1]} : vector<1x4xf32> to vector<1x1xf32>
    %183 = vector.extract_strided_slice %180 {offsets = [0, 2], sizes = [1, 1], strides = [1, 1]} : vector<1x4xf32> to vector<1x1xf32>
    %184 = vector.extract_strided_slice %180 {offsets = [0, 3], sizes = [1, 1], strides = [1, 1]} : vector<1x4xf32> to vector<1x1xf32>
    %185 = arith.mulf %182, %136 : vector<1x1xf32>
    %cst_20 = arith.constant 2.000000e+00 : f32
    %186 = vector.broadcast %cst_20 : f32 to vector<1x1xf32>
    %187 = arith.mulf %186, %183 : vector<1x1xf32>
    %cst_21 = arith.constant 1.000000e+00 : f32
    %188 = vector.broadcast %cst_21 : f32 to vector<1x1xf32>
    %189 = arith.subf %187, %188 : vector<1x1xf32>
    %190 = arith.mulf %181, %189 : vector<1x1xf32>
    %191 = arith.addf %185, %190 : vector<1x1xf32>
    %192 = vector.extract_strided_slice %4 {offsets = [1, 0], sizes = [1, 4], strides = [1, 1]} : vector<2x4xf32> to vector<1x4xf32>
    %193 = vector.broadcast %184 : vector<1x1xf32> to vector<1x4xf32>
    %194 = arith.mulf %193, %192 : vector<1x4xf32>
    %195 = math.tanh %191 : vector<1x1xf32>
    %196 = arith.mulf %184, %195 : vector<1x1xf32>
    %197 = vector.broadcast %195 : vector<1x1xf32> to vector<1x4xf32>
    %198 = arith.mulf %194, %197 : vector<1x4xf32>
    %199 = vector.extract_strided_slice %31 {offsets = [3, 0], sizes = [1, 4], strides = [1, 1]} : vector<8x4xf32> to vector<1x4xf32>
    %200 = arith.addf %199, %170 : vector<1x4xf32>
    %201 = arith.negf %200 : vector<1x4xf32>
    %202 = math.exp %201 : vector<1x4xf32>
    %cst_22 = arith.constant 1.000000e+00 : f32
    %203 = vector.broadcast %cst_22 : f32 to vector<1x4xf32>
    %204 = arith.addf %203, %202 : vector<1x4xf32>
    %205 = arith.divf %203, %204 : vector<1x4xf32>
    %206 = vector.extract_strided_slice %205 {offsets = [0, 0], sizes = [1, 1], strides = [1, 1]} : vector<1x4xf32> to vector<1x1xf32>
    %207 = vector.extract_strided_slice %205 {offsets = [0, 1], sizes = [1, 1], strides = [1, 1]} : vector<1x4xf32> to vector<1x1xf32>
    %208 = vector.extract_strided_slice %205 {offsets = [0, 2], sizes = [1, 1], strides = [1, 1]} : vector<1x4xf32> to vector<1x1xf32>
    %209 = vector.extract_strided_slice %205 {offsets = [0, 3], sizes = [1, 1], strides = [1, 1]} : vector<1x4xf32> to vector<1x1xf32>
    %210 = arith.mulf %207, %161 : vector<1x1xf32>
    %cst_23 = arith.constant 2.000000e+00 : f32
    %211 = vector.broadcast %cst_23 : f32 to vector<1x1xf32>
    %212 = arith.mulf %211, %208 : vector<1x1xf32>
    %cst_24 = arith.constant 1.000000e+00 : f32
    %213 = vector.broadcast %cst_24 : f32 to vector<1x1xf32>
    %214 = arith.subf %212, %213 : vector<1x1xf32>
    %215 = arith.mulf %206, %214 : vector<1x1xf32>
    %216 = arith.addf %210, %215 : vector<1x1xf32>
    %217 = vector.extract_strided_slice %4 {offsets = [0, 0], sizes = [1, 4], strides = [1, 1]} : vector<2x4xf32> to vector<1x4xf32>
    %218 = vector.broadcast %209 : vector<1x1xf32> to vector<1x4xf32>
    %219 = arith.mulf %218, %217 : vector<1x4xf32>
    %220 = vector.extract_strided_slice %3 {offsets = [1, 0], sizes = [1, 4], strides = [1, 1]} : vector<2x4xf32> to vector<1x4xf32>
    %221 = vector.broadcast %209 : vector<1x1xf32> to vector<1x4xf32>
    %222 = arith.mulf %221, %220 : vector<1x4xf32>
    %223 = math.tanh %216 : vector<1x1xf32>
    %224 = vector.broadcast %223 : vector<1x1xf32> to vector<1x4xf32>
    %225 = arith.mulf %219, %224 : vector<1x4xf32>
    %226 = vector.broadcast %223 : vector<1x1xf32> to vector<1x4xf32>
    %227 = arith.mulf %222, %226 : vector<1x4xf32>
    %228 = vector.extract_strided_slice %5 {offsets = [1, 0], sizes = [1, 4], strides = [1, 1]} : vector<2x4xf32> to vector<1x4xf32>
    %229 = arith.addf %227, %228 : vector<1x4xf32>
    %230 = arith.addf %229, %198 : vector<1x4xf32>
    %231 = arith.negf %230 : vector<1x4xf32>
    %232 = math.exp %231 : vector<1x4xf32>
    %cst_25 = arith.constant 1.000000e+00 : f32
    %233 = vector.broadcast %cst_25 : f32 to vector<1x4xf32>
    %234 = arith.addf %233, %232 : vector<1x4xf32>
    %235 = arith.divf %233, %234 : vector<1x4xf32>
    %236 = vector.extract_strided_slice %235 {offsets = [0, 0], sizes = [1, 1], strides = [1, 1]} : vector<1x4xf32> to vector<1x1xf32>
    %237 = vector.extract_strided_slice %235 {offsets = [0, 1], sizes = [1, 1], strides = [1, 1]} : vector<1x4xf32> to vector<1x1xf32>
    %238 = vector.extract_strided_slice %235 {offsets = [0, 2], sizes = [1, 1], strides = [1, 1]} : vector<1x4xf32> to vector<1x1xf32>
    %239 = vector.extract_strided_slice %235 {offsets = [0, 3], sizes = [1, 1], strides = [1, 1]} : vector<1x4xf32> to vector<1x1xf32>
    %240 = arith.mulf %237, %191 : vector<1x1xf32>
    %cst_26 = arith.constant 2.000000e+00 : f32
    %241 = vector.broadcast %cst_26 : f32 to vector<1x1xf32>
    %242 = arith.mulf %241, %238 : vector<1x1xf32>
    %cst_27 = arith.constant 1.000000e+00 : f32
    %243 = vector.broadcast %cst_27 : f32 to vector<1x1xf32>
    %244 = arith.subf %242, %243 : vector<1x1xf32>
    %245 = arith.mulf %236, %244 : vector<1x1xf32>
    %246 = arith.addf %240, %245 : vector<1x1xf32>
    %247 = vector.extract_strided_slice %4 {offsets = [1, 0], sizes = [1, 4], strides = [1, 1]} : vector<2x4xf32> to vector<1x4xf32>
    %248 = vector.broadcast %239 : vector<1x1xf32> to vector<1x4xf32>
    %249 = arith.mulf %248, %247 : vector<1x4xf32>
    %250 = math.tanh %246 : vector<1x1xf32>
    %251 = arith.mulf %239, %250 : vector<1x1xf32>
    %252 = vector.broadcast %250 : vector<1x1xf32> to vector<1x4xf32>
    %253 = arith.mulf %249, %252 : vector<1x4xf32>
    %254 = vector.extract_strided_slice %31 {offsets = [4, 0], sizes = [1, 4], strides = [1, 1]} : vector<8x4xf32> to vector<1x4xf32>
    %255 = arith.addf %254, %225 : vector<1x4xf32>
    %256 = arith.negf %255 : vector<1x4xf32>
    %257 = math.exp %256 : vector<1x4xf32>
    %cst_28 = arith.constant 1.000000e+00 : f32
    %258 = vector.broadcast %cst_28 : f32 to vector<1x4xf32>
    %259 = arith.addf %258, %257 : vector<1x4xf32>
    %260 = arith.divf %258, %259 : vector<1x4xf32>
    %261 = vector.extract_strided_slice %260 {offsets = [0, 0], sizes = [1, 1], strides = [1, 1]} : vector<1x4xf32> to vector<1x1xf32>
    %262 = vector.extract_strided_slice %260 {offsets = [0, 1], sizes = [1, 1], strides = [1, 1]} : vector<1x4xf32> to vector<1x1xf32>
    %263 = vector.extract_strided_slice %260 {offsets = [0, 2], sizes = [1, 1], strides = [1, 1]} : vector<1x4xf32> to vector<1x1xf32>
    %264 = vector.extract_strided_slice %260 {offsets = [0, 3], sizes = [1, 1], strides = [1, 1]} : vector<1x4xf32> to vector<1x1xf32>
    %265 = arith.mulf %262, %216 : vector<1x1xf32>
    %cst_29 = arith.constant 2.000000e+00 : f32
    %266 = vector.broadcast %cst_29 : f32 to vector<1x1xf32>
    %267 = arith.mulf %266, %263 : vector<1x1xf32>
    %cst_30 = arith.constant 1.000000e+00 : f32
    %268 = vector.broadcast %cst_30 : f32 to vector<1x1xf32>
    %269 = arith.subf %267, %268 : vector<1x1xf32>
    %270 = arith.mulf %261, %269 : vector<1x1xf32>
    %271 = arith.addf %265, %270 : vector<1x1xf32>
    %272 = vector.extract_strided_slice %4 {offsets = [0, 0], sizes = [1, 4], strides = [1, 1]} : vector<2x4xf32> to vector<1x4xf32>
    %273 = vector.broadcast %264 : vector<1x1xf32> to vector<1x4xf32>
    %274 = arith.mulf %273, %272 : vector<1x4xf32>
    %275 = vector.extract_strided_slice %3 {offsets = [1, 0], sizes = [1, 4], strides = [1, 1]} : vector<2x4xf32> to vector<1x4xf32>
    %276 = vector.broadcast %264 : vector<1x1xf32> to vector<1x4xf32>
    %277 = arith.mulf %276, %275 : vector<1x4xf32>
    %278 = math.tanh %271 : vector<1x1xf32>
    %279 = vector.broadcast %278 : vector<1x1xf32> to vector<1x4xf32>
    %280 = arith.mulf %274, %279 : vector<1x4xf32>
    %281 = vector.broadcast %278 : vector<1x1xf32> to vector<1x4xf32>
    %282 = arith.mulf %277, %281 : vector<1x4xf32>
    %283 = vector.extract_strided_slice %5 {offsets = [1, 0], sizes = [1, 4], strides = [1, 1]} : vector<2x4xf32> to vector<1x4xf32>
    %284 = arith.addf %282, %283 : vector<1x4xf32>
    %285 = arith.addf %284, %253 : vector<1x4xf32>
    %286 = arith.negf %285 : vector<1x4xf32>
    %287 = math.exp %286 : vector<1x4xf32>
    %cst_31 = arith.constant 1.000000e+00 : f32
    %288 = vector.broadcast %cst_31 : f32 to vector<1x4xf32>
    %289 = arith.addf %288, %287 : vector<1x4xf32>
    %290 = arith.divf %288, %289 : vector<1x4xf32>
    %291 = vector.extract_strided_slice %290 {offsets = [0, 0], sizes = [1, 1], strides = [1, 1]} : vector<1x4xf32> to vector<1x1xf32>
    %292 = vector.extract_strided_slice %290 {offsets = [0, 1], sizes = [1, 1], strides = [1, 1]} : vector<1x4xf32> to vector<1x1xf32>
    %293 = vector.extract_strided_slice %290 {offsets = [0, 2], sizes = [1, 1], strides = [1, 1]} : vector<1x4xf32> to vector<1x1xf32>
    %294 = vector.extract_strided_slice %290 {offsets = [0, 3], sizes = [1, 1], strides = [1, 1]} : vector<1x4xf32> to vector<1x1xf32>
    %295 = arith.mulf %292, %246 : vector<1x1xf32>
    %cst_32 = arith.constant 2.000000e+00 : f32
    %296 = vector.broadcast %cst_32 : f32 to vector<1x1xf32>
    %297 = arith.mulf %296, %293 : vector<1x1xf32>
    %cst_33 = arith.constant 1.000000e+00 : f32
    %298 = vector.broadcast %cst_33 : f32 to vector<1x1xf32>
    %299 = arith.subf %297, %298 : vector<1x1xf32>
    %300 = arith.mulf %291, %299 : vector<1x1xf32>
    %301 = arith.addf %295, %300 : vector<1x1xf32>
    %302 = vector.extract_strided_slice %4 {offsets = [1, 0], sizes = [1, 4], strides = [1, 1]} : vector<2x4xf32> to vector<1x4xf32>
    %303 = vector.broadcast %294 : vector<1x1xf32> to vector<1x4xf32>
    %304 = arith.mulf %303, %302 : vector<1x4xf32>
    %305 = math.tanh %301 : vector<1x1xf32>
    %306 = arith.mulf %294, %305 : vector<1x1xf32>
    %307 = vector.broadcast %305 : vector<1x1xf32> to vector<1x4xf32>
    %308 = arith.mulf %304, %307 : vector<1x4xf32>
    %309 = vector.extract_strided_slice %31 {offsets = [5, 0], sizes = [1, 4], strides = [1, 1]} : vector<8x4xf32> to vector<1x4xf32>
    %310 = arith.addf %309, %280 : vector<1x4xf32>
    %311 = arith.negf %310 : vector<1x4xf32>
    %312 = math.exp %311 : vector<1x4xf32>
    %cst_34 = arith.constant 1.000000e+00 : f32
    %313 = vector.broadcast %cst_34 : f32 to vector<1x4xf32>
    %314 = arith.addf %313, %312 : vector<1x4xf32>
    %315 = arith.divf %313, %314 : vector<1x4xf32>
    %316 = vector.extract_strided_slice %315 {offsets = [0, 0], sizes = [1, 1], strides = [1, 1]} : vector<1x4xf32> to vector<1x1xf32>
    %317 = vector.extract_strided_slice %315 {offsets = [0, 1], sizes = [1, 1], strides = [1, 1]} : vector<1x4xf32> to vector<1x1xf32>
    %318 = vector.extract_strided_slice %315 {offsets = [0, 2], sizes = [1, 1], strides = [1, 1]} : vector<1x4xf32> to vector<1x1xf32>
    %319 = vector.extract_strided_slice %315 {offsets = [0, 3], sizes = [1, 1], strides = [1, 1]} : vector<1x4xf32> to vector<1x1xf32>
    %320 = arith.mulf %317, %271 : vector<1x1xf32>
    %cst_35 = arith.constant 2.000000e+00 : f32
    %321 = vector.broadcast %cst_35 : f32 to vector<1x1xf32>
    %322 = arith.mulf %321, %318 : vector<1x1xf32>
    %cst_36 = arith.constant 1.000000e+00 : f32
    %323 = vector.broadcast %cst_36 : f32 to vector<1x1xf32>
    %324 = arith.subf %322, %323 : vector<1x1xf32>
    %325 = arith.mulf %316, %324 : vector<1x1xf32>
    %326 = arith.addf %320, %325 : vector<1x1xf32>
    %327 = vector.extract_strided_slice %4 {offsets = [0, 0], sizes = [1, 4], strides = [1, 1]} : vector<2x4xf32> to vector<1x4xf32>
    %328 = vector.broadcast %319 : vector<1x1xf32> to vector<1x4xf32>
    %329 = arith.mulf %328, %327 : vector<1x4xf32>
    %330 = vector.extract_strided_slice %3 {offsets = [1, 0], sizes = [1, 4], strides = [1, 1]} : vector<2x4xf32> to vector<1x4xf32>
    %331 = vector.broadcast %319 : vector<1x1xf32> to vector<1x4xf32>
    %332 = arith.mulf %331, %330 : vector<1x4xf32>
    %333 = math.tanh %326 : vector<1x1xf32>
    %334 = vector.broadcast %333 : vector<1x1xf32> to vector<1x4xf32>
    %335 = arith.mulf %329, %334 : vector<1x4xf32>
    %336 = vector.broadcast %333 : vector<1x1xf32> to vector<1x4xf32>
    %337 = arith.mulf %332, %336 : vector<1x4xf32>
    %338 = vector.extract_strided_slice %5 {offsets = [1, 0], sizes = [1, 4], strides = [1, 1]} : vector<2x4xf32> to vector<1x4xf32>
    %339 = arith.addf %337, %338 : vector<1x4xf32>
    %340 = arith.addf %339, %308 : vector<1x4xf32>
    %341 = arith.negf %340 : vector<1x4xf32>
    %342 = math.exp %341 : vector<1x4xf32>
    %cst_37 = arith.constant 1.000000e+00 : f32
    %343 = vector.broadcast %cst_37 : f32 to vector<1x4xf32>
    %344 = arith.addf %343, %342 : vector<1x4xf32>
    %345 = arith.divf %343, %344 : vector<1x4xf32>
    %346 = vector.extract_strided_slice %345 {offsets = [0, 0], sizes = [1, 1], strides = [1, 1]} : vector<1x4xf32> to vector<1x1xf32>
    %347 = vector.extract_strided_slice %345 {offsets = [0, 1], sizes = [1, 1], strides = [1, 1]} : vector<1x4xf32> to vector<1x1xf32>
    %348 = vector.extract_strided_slice %345 {offsets = [0, 2], sizes = [1, 1], strides = [1, 1]} : vector<1x4xf32> to vector<1x1xf32>
    %349 = vector.extract_strided_slice %345 {offsets = [0, 3], sizes = [1, 1], strides = [1, 1]} : vector<1x4xf32> to vector<1x1xf32>
    %350 = arith.mulf %347, %301 : vector<1x1xf32>
    %cst_38 = arith.constant 2.000000e+00 : f32
    %351 = vector.broadcast %cst_38 : f32 to vector<1x1xf32>
    %352 = arith.mulf %351, %348 : vector<1x1xf32>
    %cst_39 = arith.constant 1.000000e+00 : f32
    %353 = vector.broadcast %cst_39 : f32 to vector<1x1xf32>
    %354 = arith.subf %352, %353 : vector<1x1xf32>
    %355 = arith.mulf %346, %354 : vector<1x1xf32>
    %356 = arith.addf %350, %355 : vector<1x1xf32>
    %357 = vector.extract_strided_slice %4 {offsets = [1, 0], sizes = [1, 4], strides = [1, 1]} : vector<2x4xf32> to vector<1x4xf32>
    %358 = vector.broadcast %349 : vector<1x1xf32> to vector<1x4xf32>
    %359 = arith.mulf %358, %357 : vector<1x4xf32>
    %360 = math.tanh %356 : vector<1x1xf32>
    %361 = arith.mulf %349, %360 : vector<1x1xf32>
    %362 = vector.broadcast %360 : vector<1x1xf32> to vector<1x4xf32>
    %363 = arith.mulf %359, %362 : vector<1x4xf32>
    %364 = vector.extract_strided_slice %31 {offsets = [6, 0], sizes = [1, 4], strides = [1, 1]} : vector<8x4xf32> to vector<1x4xf32>
    %365 = arith.addf %364, %335 : vector<1x4xf32>
    %366 = arith.negf %365 : vector<1x4xf32>
    %367 = math.exp %366 : vector<1x4xf32>
    %cst_40 = arith.constant 1.000000e+00 : f32
    %368 = vector.broadcast %cst_40 : f32 to vector<1x4xf32>
    %369 = arith.addf %368, %367 : vector<1x4xf32>
    %370 = arith.divf %368, %369 : vector<1x4xf32>
    %371 = vector.extract_strided_slice %370 {offsets = [0, 0], sizes = [1, 1], strides = [1, 1]} : vector<1x4xf32> to vector<1x1xf32>
    %372 = vector.extract_strided_slice %370 {offsets = [0, 1], sizes = [1, 1], strides = [1, 1]} : vector<1x4xf32> to vector<1x1xf32>
    %373 = vector.extract_strided_slice %370 {offsets = [0, 2], sizes = [1, 1], strides = [1, 1]} : vector<1x4xf32> to vector<1x1xf32>
    %374 = vector.extract_strided_slice %370 {offsets = [0, 3], sizes = [1, 1], strides = [1, 1]} : vector<1x4xf32> to vector<1x1xf32>
    %375 = arith.mulf %372, %326 : vector<1x1xf32>
    %cst_41 = arith.constant 2.000000e+00 : f32
    %376 = vector.broadcast %cst_41 : f32 to vector<1x1xf32>
    %377 = arith.mulf %376, %373 : vector<1x1xf32>
    %cst_42 = arith.constant 1.000000e+00 : f32
    %378 = vector.broadcast %cst_42 : f32 to vector<1x1xf32>
    %379 = arith.subf %377, %378 : vector<1x1xf32>
    %380 = arith.mulf %371, %379 : vector<1x1xf32>
    %381 = arith.addf %375, %380 : vector<1x1xf32>
    %382 = vector.extract_strided_slice %4 {offsets = [0, 0], sizes = [1, 4], strides = [1, 1]} : vector<2x4xf32> to vector<1x4xf32>
    %383 = vector.broadcast %374 : vector<1x1xf32> to vector<1x4xf32>
    %384 = arith.mulf %383, %382 : vector<1x4xf32>
    %385 = vector.extract_strided_slice %3 {offsets = [1, 0], sizes = [1, 4], strides = [1, 1]} : vector<2x4xf32> to vector<1x4xf32>
    %386 = vector.broadcast %374 : vector<1x1xf32> to vector<1x4xf32>
    %387 = arith.mulf %386, %385 : vector<1x4xf32>
    %388 = math.tanh %381 : vector<1x1xf32>
    %389 = vector.broadcast %388 : vector<1x1xf32> to vector<1x4xf32>
    %390 = arith.mulf %384, %389 : vector<1x4xf32>
    %391 = vector.broadcast %388 : vector<1x1xf32> to vector<1x4xf32>
    %392 = arith.mulf %387, %391 : vector<1x4xf32>
    %393 = vector.extract_strided_slice %5 {offsets = [1, 0], sizes = [1, 4], strides = [1, 1]} : vector<2x4xf32> to vector<1x4xf32>
    %394 = arith.addf %392, %393 : vector<1x4xf32>
    %395 = arith.addf %394, %363 : vector<1x4xf32>
    %396 = arith.negf %395 : vector<1x4xf32>
    %397 = math.exp %396 : vector<1x4xf32>
    %cst_43 = arith.constant 1.000000e+00 : f32
    %398 = vector.broadcast %cst_43 : f32 to vector<1x4xf32>
    %399 = arith.addf %398, %397 : vector<1x4xf32>
    %400 = arith.divf %398, %399 : vector<1x4xf32>
    %401 = vector.extract_strided_slice %400 {offsets = [0, 0], sizes = [1, 1], strides = [1, 1]} : vector<1x4xf32> to vector<1x1xf32>
    %402 = vector.extract_strided_slice %400 {offsets = [0, 1], sizes = [1, 1], strides = [1, 1]} : vector<1x4xf32> to vector<1x1xf32>
    %403 = vector.extract_strided_slice %400 {offsets = [0, 2], sizes = [1, 1], strides = [1, 1]} : vector<1x4xf32> to vector<1x1xf32>
    %404 = vector.extract_strided_slice %400 {offsets = [0, 3], sizes = [1, 1], strides = [1, 1]} : vector<1x4xf32> to vector<1x1xf32>
    %405 = arith.mulf %402, %356 : vector<1x1xf32>
    %cst_44 = arith.constant 2.000000e+00 : f32
    %406 = vector.broadcast %cst_44 : f32 to vector<1x1xf32>
    %407 = arith.mulf %406, %403 : vector<1x1xf32>
    %cst_45 = arith.constant 1.000000e+00 : f32
    %408 = vector.broadcast %cst_45 : f32 to vector<1x1xf32>
    %409 = arith.subf %407, %408 : vector<1x1xf32>
    %410 = arith.mulf %401, %409 : vector<1x1xf32>
    %411 = arith.addf %405, %410 : vector<1x1xf32>
    %412 = vector.extract_strided_slice %4 {offsets = [1, 0], sizes = [1, 4], strides = [1, 1]} : vector<2x4xf32> to vector<1x4xf32>
    %413 = vector.broadcast %404 : vector<1x1xf32> to vector<1x4xf32>
    %414 = arith.mulf %413, %412 : vector<1x4xf32>
    %415 = math.tanh %411 : vector<1x1xf32>
    %416 = arith.mulf %404, %415 : vector<1x1xf32>
    %417 = vector.broadcast %415 : vector<1x1xf32> to vector<1x4xf32>
    %418 = arith.mulf %414, %417 : vector<1x4xf32>
    %419 = vector.extract_strided_slice %31 {offsets = [7, 0], sizes = [1, 4], strides = [1, 1]} : vector<8x4xf32> to vector<1x4xf32>
    %420 = arith.addf %419, %390 : vector<1x4xf32>
    %421 = arith.negf %420 : vector<1x4xf32>
    %422 = math.exp %421 : vector<1x4xf32>
    %cst_46 = arith.constant 1.000000e+00 : f32
    %423 = vector.broadcast %cst_46 : f32 to vector<1x4xf32>
    %424 = arith.addf %423, %422 : vector<1x4xf32>
    %425 = arith.divf %423, %424 : vector<1x4xf32>
    %426 = vector.extract_strided_slice %425 {offsets = [0, 0], sizes = [1, 1], strides = [1, 1]} : vector<1x4xf32> to vector<1x1xf32>
    %427 = vector.extract_strided_slice %425 {offsets = [0, 1], sizes = [1, 1], strides = [1, 1]} : vector<1x4xf32> to vector<1x1xf32>
    %428 = vector.extract_strided_slice %425 {offsets = [0, 2], sizes = [1, 1], strides = [1, 1]} : vector<1x4xf32> to vector<1x1xf32>
    %429 = vector.extract_strided_slice %425 {offsets = [0, 3], sizes = [1, 1], strides = [1, 1]} : vector<1x4xf32> to vector<1x1xf32>
    %430 = arith.mulf %427, %381 : vector<1x1xf32>
    %cst_47 = arith.constant 2.000000e+00 : f32
    %431 = vector.broadcast %cst_47 : f32 to vector<1x1xf32>
    %432 = arith.mulf %431, %428 : vector<1x1xf32>
    %cst_48 = arith.constant 1.000000e+00 : f32
    %433 = vector.broadcast %cst_48 : f32 to vector<1x1xf32>
    %434 = arith.subf %432, %433 : vector<1x1xf32>
    %435 = arith.mulf %426, %434 : vector<1x1xf32>
    %436 = arith.addf %430, %435 : vector<1x1xf32>
    %437 = vector.extract_strided_slice %3 {offsets = [1, 0], sizes = [1, 4], strides = [1, 1]} : vector<2x4xf32> to vector<1x4xf32>
    %438 = vector.broadcast %429 : vector<1x1xf32> to vector<1x4xf32>
    %439 = arith.mulf %438, %437 : vector<1x4xf32>
    %440 = math.tanh %436 : vector<1x1xf32>
    %441 = arith.mulf %429, %440 : vector<1x1xf32>
    %442 = vector.broadcast %440 : vector<1x1xf32> to vector<1x4xf32>
    %443 = arith.mulf %439, %442 : vector<1x4xf32>
    %444 = vector.extract_strided_slice %5 {offsets = [1, 0], sizes = [1, 4], strides = [1, 1]} : vector<2x4xf32> to vector<1x4xf32>
    %445 = arith.addf %443, %444 : vector<1x4xf32>
    %446 = arith.addf %445, %418 : vector<1x4xf32>
    %447 = arith.negf %446 : vector<1x4xf32>
    %448 = math.exp %447 : vector<1x4xf32>
    %cst_49 = arith.constant 1.000000e+00 : f32
    %449 = vector.broadcast %cst_49 : f32 to vector<1x4xf32>
    %450 = arith.addf %449, %448 : vector<1x4xf32>
    %451 = arith.divf %449, %450 : vector<1x4xf32>
    %452 = vector.extract_strided_slice %451 {offsets = [0, 0], sizes = [1, 1], strides = [1, 1]} : vector<1x4xf32> to vector<1x1xf32>
    %453 = vector.extract_strided_slice %451 {offsets = [0, 1], sizes = [1, 1], strides = [1, 1]} : vector<1x4xf32> to vector<1x1xf32>
    %454 = vector.extract_strided_slice %451 {offsets = [0, 2], sizes = [1, 1], strides = [1, 1]} : vector<1x4xf32> to vector<1x1xf32>
    %455 = vector.extract_strided_slice %451 {offsets = [0, 3], sizes = [1, 1], strides = [1, 1]} : vector<1x4xf32> to vector<1x1xf32>
    %456 = arith.mulf %453, %411 : vector<1x1xf32>
    %cst_50 = arith.constant 2.000000e+00 : f32
    %457 = vector.broadcast %cst_50 : f32 to vector<1x1xf32>
    %458 = arith.mulf %457, %454 : vector<1x1xf32>
    %cst_51 = arith.constant 1.000000e+00 : f32
    %459 = vector.broadcast %cst_51 : f32 to vector<1x1xf32>
    %460 = arith.subf %458, %459 : vector<1x1xf32>
    %461 = arith.mulf %452, %460 : vector<1x1xf32>
    %462 = arith.addf %456, %461 : vector<1x1xf32>
    %463 = math.tanh %462 : vector<1x1xf32>
    %464 = arith.mulf %455, %463 : vector<1x1xf32>
    %465 = tpu.iota {dimensions = array<i32: 1>} : vector<1x12xi32>
    %cst_52 = arith.constant 0.000000e+00 : f32
    %466 = vector.broadcast %cst_52 : f32 to vector<1x12xf32>
    %c0_i32 = arith.constant 0 : i32
    %467 = vector.broadcast %c0_i32 : i32 to vector<1x12xi32>
    %468 = arith.cmpi eq, %465, %467 : vector<1x12xi32>
    %469 = vector.shape_cast %86 : vector<1x1xf32> to vector<1x1xf32>
    %470 = vector.broadcast %469 : vector<1x1xf32> to vector<1x12xf32>
    %471 = arith.select %468, %470, %466 : vector<1x12xi1>, vector<1x12xf32>
    %c1_i32 = arith.constant 1 : i32
    %472 = vector.broadcast %c1_i32 : i32 to vector<1x12xi32>
    %473 = arith.cmpi eq, %465, %472 : vector<1x12xi32>
    %474 = vector.shape_cast %141 : vector<1x1xf32> to vector<1x1xf32>
    %475 = vector.broadcast %474 : vector<1x1xf32> to vector<1x12xf32>
    %476 = arith.select %473, %475, %471 : vector<1x12xi1>, vector<1x12xf32>
    %c2_i32 = arith.constant 2 : i32
    %477 = vector.broadcast %c2_i32 : i32 to vector<1x12xi32>
    %478 = arith.cmpi eq, %465, %477 : vector<1x12xi32>
    %479 = vector.shape_cast %196 : vector<1x1xf32> to vector<1x1xf32>
    %480 = vector.broadcast %479 : vector<1x1xf32> to vector<1x12xf32>
    %481 = arith.select %478, %480, %476 : vector<1x12xi1>, vector<1x12xf32>
    %c3_i32 = arith.constant 3 : i32
    %482 = vector.broadcast %c3_i32 : i32 to vector<1x12xi32>
    %483 = arith.cmpi eq, %465, %482 : vector<1x12xi32>
    %484 = vector.shape_cast %251 : vector<1x1xf32> to vector<1x1xf32>
    %485 = vector.broadcast %484 : vector<1x1xf32> to vector<1x12xf32>
    %486 = arith.select %483, %485, %481 : vector<1x12xi1>, vector<1x12xf32>
    %c4_i32 = arith.constant 4 : i32
    %487 = vector.broadcast %c4_i32 : i32 to vector<1x12xi32>
    %488 = arith.cmpi eq, %465, %487 : vector<1x12xi32>
    %489 = vector.shape_cast %306 : vector<1x1xf32> to vector<1x1xf32>
    %490 = vector.broadcast %489 : vector<1x1xf32> to vector<1x12xf32>
    %491 = arith.select %488, %490, %486 : vector<1x12xi1>, vector<1x12xf32>
    %c5_i32 = arith.constant 5 : i32
    %492 = vector.broadcast %c5_i32 : i32 to vector<1x12xi32>
    %493 = arith.cmpi eq, %465, %492 : vector<1x12xi32>
    %494 = vector.shape_cast %361 : vector<1x1xf32> to vector<1x1xf32>
    %495 = vector.broadcast %494 : vector<1x1xf32> to vector<1x12xf32>
    %496 = arith.select %493, %495, %491 : vector<1x12xi1>, vector<1x12xf32>
    %c6_i32 = arith.constant 6 : i32
    %497 = vector.broadcast %c6_i32 : i32 to vector<1x12xi32>
    %498 = arith.cmpi eq, %465, %497 : vector<1x12xi32>
    %499 = vector.shape_cast %416 : vector<1x1xf32> to vector<1x1xf32>
    %500 = vector.broadcast %499 : vector<1x1xf32> to vector<1x12xf32>
    %501 = arith.select %498, %500, %496 : vector<1x12xi1>, vector<1x12xf32>
    %c7_i32 = arith.constant 7 : i32
    %502 = vector.broadcast %c7_i32 : i32 to vector<1x12xi32>
    %503 = arith.cmpi eq, %465, %502 : vector<1x12xi32>
    %504 = vector.shape_cast %464 : vector<1x1xf32> to vector<1x1xf32>
    %505 = vector.broadcast %504 : vector<1x1xf32> to vector<1x12xf32>
    %506 = arith.select %503, %505, %501 : vector<1x12xi1>, vector<1x12xf32>
    %c8_i32 = arith.constant 8 : i32
    %507 = vector.broadcast %c8_i32 : i32 to vector<1x12xi32>
    %508 = arith.cmpi eq, %465, %507 : vector<1x12xi32>
    %509 = vector.shape_cast %441 : vector<1x1xf32> to vector<1x1xf32>
    %510 = vector.broadcast %509 : vector<1x1xf32> to vector<1x12xf32>
    %511 = arith.select %508, %510, %506 : vector<1x12xi1>, vector<1x12xf32>
    %c10_i32 = arith.constant 10 : i32
    %512 = vector.broadcast %c10_i32 : i32 to vector<1x12xi32>
    %513 = arith.cmpi eq, %465, %512 : vector<1x12xi32>
    %514 = vector.shape_cast %436 : vector<1x1xf32> to vector<1x1xf32>
    %515 = vector.broadcast %514 : vector<1x1xf32> to vector<1x12xf32>
    %516 = arith.select %513, %515, %511 : vector<1x12xi1>, vector<1x12xf32>
    %c9_i32 = arith.constant 9 : i32
    %517 = vector.broadcast %c9_i32 : i32 to vector<1x12xi32>
    %518 = arith.cmpi eq, %465, %517 : vector<1x12xi32>
    %519 = vector.shape_cast %464 : vector<1x1xf32> to vector<1x1xf32>
    %520 = vector.broadcast %519 : vector<1x1xf32> to vector<1x12xf32>
    %521 = arith.select %518, %520, %516 : vector<1x12xi1>, vector<1x12xf32>
    %c11_i32 = arith.constant 11 : i32
    %522 = vector.broadcast %c11_i32 : i32 to vector<1x12xi32>
    %523 = arith.cmpi eq, %465, %522 : vector<1x12xi32>
    %524 = vector.shape_cast %462 : vector<1x1xf32> to vector<1x1xf32>
    %525 = vector.broadcast %524 : vector<1x1xf32> to vector<1x12xf32>
    %526 = arith.select %523, %525, %521 : vector<1x12xi1>, vector<1x12xf32>
    %c0_53 = arith.constant 0 : index
    %c0_54 = arith.constant 0 : index
    %527 = vector.load %arg3[%c0_53, %c0_54] : memref<1x12xf32, #tpu.memory_space<vmem>>, vector<1x12xf32>
    tpu.vector_store %arg3[%c0_53, %c0_54], %526 {strides = array<i32>} : memref<1x12xf32, #tpu.memory_space<vmem>>, vector<1x12xf32>,
    return
  }
  func.func @transform_0(%arg0: i32) -> (i32, i32) {
    %c0_i32 = arith.constant 0 : i32
    %c0_i32_0 = arith.constant 0 : i32
    %c0_i32_1 = arith.constant 0 : i32
    return %c0_i32, %c0_i32_0 : i32, i32
  }
  func.func @transform_1(%arg0: i32) -> (i32, i32) {
    %c0_i32 = arith.constant 0 : i32
    %c0_i32_0 = arith.constant 0 : i32
    %c0_i32_1 = arith.constant 0 : i32
    return %c0_i32, %c0_i32_0 : i32, i32
  }
  func.func @transform_2(%arg0: i32) -> (i32, i32) {
    %c0_i32 = arith.constant 0 : i32
    %c0_i32_0 = arith.constant 0 : i32
    %c0_i32_1 = arith.constant 0 : i32
    return %c0_i32, %c0_i32_0 : i32, i32
  }
}

</mosaic_0001>

<llo_original>
// kernel: tpu_custom_call.1
$region0: #{tpu_custom_call.1}
  #allocation0 [shape = 'u32[]', space=smem, size = 0x4, offset = 0x4, fixed_abs, tag = 'smem constant byte address 0x4 - core index']
  #allocation1 [shape = 'u32[144,128]{1,0:T(1,128)}', space=vmem, size = 0x12000, scoped, tag = 'internal scratch']
  %s0 = inlined_call_operand.vmem [shape: f32[8,4], index: 0, kind: input, shape index: {}]
  %s1 = inlined_call_operand.vmem [shape: f32[10,4], index: 1, kind: input, shape index: {}]
  %s2 = inlined_call_operand.hbm [shape: f32[1,12], index: 2, kind: output, shape index: {}]
  %s3 = sld [smem:[#allocation0]]
  $region18: #{tpu_custom_call.1} parent=0
    _
  %s5 = ssub.s32 1, %s3
  %s6 = scalar_select 0, %s5, %s3
  $region1: #{tpu_custom_call.1} parent=0
    #allocation2 [shape = 'u8[512]{0}', space=vmem, size = 0x400, scoped, tag = 'output window, operand 0, single buffered']
    #allocation3 [shape = 's32[1]{0}', space=sflag, size = 0x4, scoped, tag = 'scoped memory for tpu_custom_call.1']
    %7 = vsyncpa [#allocation3], 0
    // Predicated region
    $region2: #{tpu_custom_call.1} parent=1 // pred_check
      _
    $region3: #{tpu_custom_call.1} parent=1 // pred_check_branch
      %9 = sbr.rel (0) target = $region5
    $region4: #{tpu_custom_call.1} parent=1 // pred_region
      _
    $region5: #{tpu_custom_call.1} parent=1 // pred_fallthru
      _
    // Predicated region
    $region6: #{tpu_custom_call.1} parent=1 // pred_check
      _
    $region7: #{tpu_custom_call.1} parent=1 // pred_check_branch
      %11 = sbr.rel (0) target = $region9
    $region8: #{tpu_custom_call.1} parent=1 // pred_region
      _
    $region9: #{tpu_custom_call.1} parent=1 // pred_fallthru
      _
    %v12 = vld [vmem:[%s0] sm:$0xff]
    %v13 = vld [vmem:[%s1] sm:$0xff]
    %v14 = vld [vmem:[%s1 + $0x8] sm:$0x3]
    %16 = vset.pattern.permute.xlu0 0
    %17 = vperm.xlu0 %16, %v12
    %v18 = vpop.permute.xlu0 %17
    %v20 = vlaneseq
    %v21 = vshrl.u32 %v20, 7
    %v22 = vsub.s32 0, %v21
    %v23 = vrot.slane %v13, %v22
    %v24 = vmul.f32 %v18, %v23
    %25 = vset.pattern.permute.xlu0 1
    %26 = vperm.xlu0 %25, %v12
    %v27 = vpop.permute.xlu0 %26
    %v29 = vlaneseq
    %v30 = vshrl.u32 %v29, 7
    %v31 = vsub.s32 1, %v30
    %v32 = vrot.slane %v13, %v31
    %v33 = vmul.f32 %v27, %v32
    %34 = vset.pattern.permute.xlu0 2
    %35 = vperm.xlu0 %34, %v12
    %v36 = vpop.permute.xlu0 %35
    %v38 = vlaneseq
    %v39 = vshrl.u32 %v38, 7
    %v40 = vsub.s32 2, %v39
    %v41 = vrot.slane %v13, %v40
    %v42 = vmul.f32 %v36, %v41
    %43 = vset.pattern.permute.xlu0 3
    %44 = vperm.xlu0 %43, %v12
    %v45 = vpop.permute.xlu0 %44
    %v47 = vlaneseq
    %v48 = vshrl.u32 %v47, 7
    %v49 = vsub.s32 3, %v48
    %v50 = vrot.slane %v13, %v49
    %v51 = vmul.f32 %v45, %v50
    %v52 = vadd.f32 %v24, %v33
    %v53 = vadd.f32 %v42, %v51
    %v54 = vadd.f32 %v52, %v53
    %v55 = vlaneseq
    %v56 = vshrl.u32 %v55, 7
    %v57 = vsub.s32 0, %v56
    %v58 = vrot.slane %v14, %v57
    %v59 = vadd.f32 %v54, %v58
    %v60 = vadd.f32 %v59, 0.0
    %v61 = vxor.u32 %v60, 2147483648
    %v62 = vmul.f32 %v61, 1.442695
    %v63 = vpow.pop %v62
    %v64 = vadd.f32 %v63, 1.0
    %v65 = vrcp.pop %v64
    %v66 = vmul.f32 1.0, %v65
    %v67 = vmul.f32 %v66, 0.0
    %v68 = vmul.f32 %v66, 2.0
    %v69 = vsub.f32 %v68, 1.0
    %71 = vrot.lane.b32.xlu0 %v69, 126
    %v72 = vpop.permute.xlu0 %71
    %v74 = vmul.f32 %v66, %v72
    %76 = vrot.lane.b32.xlu0 %v74, 1
    %v77 = vpop.permute.xlu0 %76
    %v79 = vadd.f32 %v67, %v77
    %81 = vset.pattern.permute.xlu0 3
    %82 = vperm.xlu0 %81, %v66
    %v83 = vpop.permute.xlu0 %82
    %v86 = vrot.slane %v13, 6
    %v88 = vmul.f32 %v83, %v86
    %v89 = vrot.slane %v13, 5
    %v91 = vmul.f32 %v83, %v89
    %v92 = vtanh.pop %v79
    %94 = vset.pattern.permute.xlu0 1
    %95 = vperm.xlu0 %94, %v92
    %v96 = vpop.permute.xlu0 %95
    %v98 = vmul.f32 %v88, %v96
    %v99 = vmul.f32 %v91, %v96
    %v101 = vrot.slane %v14, 1
    %v103 = vadd.f32 %v99, %v101
    %v104 = vadd.f32 %v103, 0.0
    %v105 = vxor.u32 %v104, 2147483648
    %v106 = vmul.f32 %v105, 1.442695
    %v107 = vpow.pop %v106
    %v108 = vadd.f32 %v107, 1.0
    %v109 = vrcp.pop %v108
    %v110 = vmul.f32 1.0, %v109
    %v111 = vmul.f32 %v110, 0.0
    %v112 = vmul.f32 %v110, 2.0
    %v113 = vsub.f32 %v112, 1.0
    %115 = vrot.lane.b32.xlu0 %v113, 126
    %v116 = vpop.permute.xlu0 %115
    %v118 = vmul.f32 %v110, %v116
    %120 = vrot.lane.b32.xlu0 %v118, 1
    %v121 = vpop.permute.xlu0 %120
    %v123 = vadd.f32 %v111, %v121
    %125 = vset.pattern.permute.xlu0 3
    %126 = vperm.xlu0 %125, %v110
    %v127 = vpop.permute.xlu0 %126
    %v129 = vrot.slane %v13, 7
    %v131 = vmul.f32 %v127, %v129
    %v132 = vtanh.pop %v123
    %134 = vrot.lane.b32.xlu0 %v132, 2
    %v135 = vpop.permute.xlu0 %134
    %v137 = vmul.f32 %v110, %v135
    %138 = vset.pattern.permute.xlu0 1
    %139 = vperm.xlu0 %138, %v132
    %v140 = vpop.permute.xlu0 %139
    %v142 = vmul.f32 %v131, %v140
    %v144 = vrot.slane %v98, 7
    %v146 = vadd.f32 %v59, %v144
    %v147 = vxor.u32 %v146, 2147483648
    %v148 = vmul.f32 %v147, 1.442695
    %v149 = vpow.pop %v148
    %v150 = vadd.f32 %v149, 1.0
    %v151 = vrcp.pop %v150
    %v152 = vmul.f32 1.0, %v151
    %v154 = vrot.slane %v79, 7
    %v156 = vmul.f32 %v152, %v154
    %v157 = vmul.f32 %v152, 2.0
    %v158 = vsub.f32 %v157, 1.0
    %160 = vrot.lane.b32.xlu0 %v158, 126
    %v161 = vpop.permute.xlu0 %160
    %v163 = vmul.f32 %v152, %v161
    %165 = vrot.lane.b32.xlu0 %v163, 1
    %v166 = vpop.permute.xlu0 %165
    %v168 = vadd.f32 %v156, %v166
    %170 = vset.pattern.permute.xlu0 3
    %171 = vperm.xlu0 %170, %v152
    %v172 = vpop.permute.xlu0 %171
    %v174 = vmul.f32 %v172, %v89
    %v175 = vrot.slane %v13, 4
    %v177 = vmul.f32 %v172, %v175
    %v178 = vtanh.pop %v168
    %180 = vset.pattern.permute.xlu0 1
    %181 = vperm.xlu0 %180, %v178
    %v182 = vpop.permute.xlu0 %181
    %v184 = vmul.f32 %v174, %v182
    %v185 = vmul.f32 %v177, %v182
    %v186 = vadd.f32 %v185, %v14
    %v188 = vrot.slane %v142, 7
    %v190 = vadd.f32 %v186, %v188
    %v191 = vxor.u32 %v190, 2147483648
    %v192 = vmul.f32 %v191, 1.442695
    %v193 = vpow.pop %v192
    %v194 = vadd.f32 %v193, 1.0
    %v195 = vrcp.pop %v194
    %v196 = vmul.f32 1.0, %v195
    %v198 = vrot.slane %v123, 7
    %v200 = vmul.f32 %v196, %v198
    %v201 = vmul.f32 %v196, 2.0
    %v202 = vsub.f32 %v201, 1.0
    %204 = vrot.lane.b32.xlu0 %v202, 126
    %v205 = vpop.permute.xlu0 %204
    %v207 = vmul.f32 %v196, %v205
    %209 = vrot.lane.b32.xlu0 %v207, 1
    %v210 = vpop.permute.xlu0 %209
    %v212 = vadd.f32 %v200, %v210
    %214 = vset.pattern.permute.xlu0 3
    %215 = vperm.xlu0 %214, %v196
    %v216 = vpop.permute.xlu0 %215
    %v218 = vmul.f32 %v216, %v86
    %v219 = vtanh.pop %v212
    %221 = vrot.lane.b32.xlu0 %v219, 2
    %v222 = vpop.permute.xlu0 %221
    %v224 = vmul.f32 %v196, %v222
    %225 = vset.pattern.permute.xlu0 1
    %226 = vperm.xlu0 %225, %v219
    %v227 = vpop.permute.xlu0 %226
    %v229 = vmul.f32 %v218, %v227
    %v231 = vrot.slane %v184, 7
    %v233 = vadd.f32 %v59, %v231
    %v234 = vxor.u32 %v233, 2147483648
    %v235 = vmul.f32 %v234, 1.442695
    %v236 = vpow.pop %v235
    %v237 = vadd.f32 %v236, 1.0
    %v238 = vrcp.pop %v237
    %v239 = vmul.f32 1.0, %v238
    %v241 = vrot.slane %v168, 7
    %v243 = vmul.f32 %v239, %v241
    %v244 = vmul.f32 %v239, 2.0
    %v245 = vsub.f32 %v244, 1.0
    %247 = vrot.lane.b32.xlu0 %v245, 126
    %v248 = vpop.permute.xlu0 %247
    %v250 = vmul.f32 %v239, %v248
    %252 = vrot.lane.b32.xlu0 %v250, 1
    %v253 = vpop.permute.xlu0 %252
    %v255 = vadd.f32 %v243, %v253
    %257 = vset.pattern.permute.xlu0 3
    %258 = vperm.xlu0 %257, %v239
    %v259 = vpop.permute.xlu0 %258
    %v261 = vmul.f32 %v259, %v175
    %v262 = vrot.slane %v13, 3
    %v264 = vmul.f32 %v259, %v262
    %v265 = vtanh.pop %v255
    %267 = vset.pattern.permute.xlu0 1
    %268 = vperm.xlu0 %267, %v265
    %v269 = vpop.permute.xlu0 %268
    %v271 = vmul.f32 %v261, %v269
    %v272 = vmul.f32 %v264, %v269
    %v273 = vrot.slane %v14, 7
    %v275 = vadd.f32 %v272, %v273
    %v277 = vrot.slane %v229, 7
    %v279 = vadd.f32 %v275, %v277
    %v280 = vxor.u32 %v279, 2147483648
    %v281 = vmul.f32 %v280, 1.442695
    %v282 = vpow.pop %v281
    %v283 = vadd.f32 %v282, 1.0
    %v284 = vrcp.pop %v283
    %v285 = vmul.f32 1.0, %v284
    %v287 = vrot.slane %v212, 7
    %v289 = vmul.f32 %v285, %v287
    %v290 = vmul.f32 %v285, 2.0
    %v291 = vsub.f32 %v290, 1.0
    %293 = vrot.lane.b32.xlu0 %v291, 126
    %v294 = vpop.permute.xlu0 %293
    %v296 = vmul.f32 %v285, %v294
    %298 = vrot.lane.b32.xlu0 %v296, 1
    %v299 = vpop.permute.xlu0 %298
    %v301 = vadd.f32 %v289, %v299
    %303 = vset.pattern.permute.xlu0 3
    %304 = vperm.xlu0 %303, %v285
    %v305 = vpop.permute.xlu0 %304
    %v307 = vmul.f32 %v305, %v89
    %v308 = vtanh.pop %v301
    %310 = vrot.lane.b32.xlu0 %v308, 2
    %v311 = vpop.permute.xlu0 %310
    %v313 = vmul.f32 %v285, %v311
    %314 = vset.pattern.permute.xlu0 1
    %315 = vperm.xlu0 %314, %v308
    %v316 = vpop.permute.xlu0 %315
    %v318 = vmul.f32 %v307, %v316
    %v320 = vrot.slane %v271, 7
    %v322 = vadd.f32 %v59, %v320
    %v323 = vxor.u32 %v322, 2147483648
    %v324 = vmul.f32 %v323, 1.442695
    %v325 = vpow.pop %v324
    %v326 = vadd.f32 %v325, 1.0
    %v327 = vrcp.pop %v326
    %v328 = vmul.f32 1.0, %v327
    %v330 = vrot.slane %v255, 7
    %v332 = vmul.f32 %v328, %v330
    %v333 = vmul.f32 %v328, 2.0
    %v334 = vsub.f32 %v333, 1.0
    %336 = vrot.lane.b32.xlu0 %v334, 126
    %v337 = vpop.permute.xlu0 %336
    %v339 = vmul.f32 %v328, %v337
    %341 = vrot.lane.b32.xlu0 %v339, 1
    %v342 = vpop.permute.xlu0 %341
    %v344 = vadd.f32 %v332, %v342
    %346 = vset.pattern.permute.xlu0 3
    %347 = vperm.xlu0 %346, %v328
    %v348 = vpop.permute.xlu0 %347
    %v350 = vmul.f32 %v348, %v262
    %v351 = vrot.slane %v13, 2
    %v353 = vmul.f32 %v348, %v351
    %v354 = vtanh.pop %v344
    %356 = vset.pattern.permute.xlu0 1
    %357 = vperm.xlu0 %356, %v354
    %v358 = vpop.permute.xlu0 %357
    %v360 = vmul.f32 %v350, %v358
    %v361 = vmul.f32 %v353, %v358
    %v362 = vrot.slane %v14, 6
    %v364 = vadd.f32 %v361, %v362
    %v366 = vrot.slane %v318, 7
    %v368 = vadd.f32 %v364, %v366
    %v369 = vxor.u32 %v368, 2147483648
    %v370 = vmul.f32 %v369, 1.442695
    %v371 = vpow.pop %v370
    %v372 = vadd.f32 %v371, 1.0
    %v373 = vrcp.pop %v372
    %v374 = vmul.f32 1.0, %v373
    %v376 = vrot.slane %v301, 7
    %v378 = vmul.f32 %v374, %v376
    %v379 = vmul.f32 %v374, 2.0
    %v380 = vsub.f32 %v379, 1.0
    %382 = vrot.lane.b32.xlu0 %v380, 126
    %v383 = vpop.permute.xlu0 %382
    %v385 = vmul.f32 %v374, %v383
    %387 = vrot.lane.b32.xlu0 %v385, 1
    %v388 = vpop.permute.xlu0 %387
    %v390 = vadd.f32 %v378, %v388
    %392 = vset.pattern.permute.xlu0 3
    %393 = vperm.xlu0 %392, %v374
    %v394 = vpop.permute.xlu0 %393
    %v396 = vmul.f32 %v394, %v175
    %v397 = vtanh.pop %v390
    %399 = vrot.lane.b32.xlu0 %v397, 2
    %v400 = vpop.permute.xlu0 %399
    %v402 = vmul.f32 %v374, %v400
    %403 = vset.pattern.permute.xlu0 1
    %404 = vperm.xlu0 %403, %v397
    %v405 = vpop.permute.xlu0 %404
    %v407 = vmul.f32 %v396, %v405
    %v409 = vrot.slane %v360, 7
    %v411 = vadd.f32 %v59, %v409
    %v412 = vxor.u32 %v411, 2147483648
    %v413 = vmul.f32 %v412, 1.442695
    %v414 = vpow.pop %v413
    %v415 = vadd.f32 %v414, 1.0
    %v416 = vrcp.pop %v415
    %v417 = vmul.f32 1.0, %v416
    %v419 = vrot.slane %v344, 7
    %v421 = vmul.f32 %v417, %v419
    %v422 = vmul.f32 %v417, 2.0
    %v423 = vsub.f32 %v422, 1.0
    %425 = vrot.lane.b32.xlu0 %v423, 126
    %v426 = vpop.permute.xlu0 %425
    %v428 = vmul.f32 %v417, %v426
    %430 = vrot.lane.b32.xlu0 %v428, 1
    %v431 = vpop.permute.xlu0 %430
    %v433 = vadd.f32 %v421, %v431
    %435 = vset.pattern.permute.xlu0 3
    %436 = vperm.xlu0 %435, %v417
    %v437 = vpop.permute.xlu0 %436
    %v439 = vmul.f32 %v437, %v351
    %v440 = vrot.slane %v13, 1
    %v442 = vmul.f32 %v437, %v440
    %v443 = vtanh.pop %v433
    %445 = vset.pattern.permute.xlu0 1
    %446 = vperm.xlu0 %445, %v443
    %v447 = vpop.permute.xlu0 %446
    %v449 = vmul.f32 %v439, %v447
    %v450 = vmul.f32 %v442, %v447
    %v451 = vrot.slane %v14, 5
    %v453 = vadd.f32 %v450, %v451
    %v455 = vrot.slane %v407, 7
    %v457 = vadd.f32 %v453, %v455
    %v458 = vxor.u32 %v457, 2147483648
    %v459 = vmul.f32 %v458, 1.442695
    %v460 = vpow.pop %v459
    %v461 = vadd.f32 %v460, 1.0
    %v462 = vrcp.pop %v461
    %v463 = vmul.f32 1.0, %v462
    %v465 = vrot.slane %v390, 7
    %v467 = vmul.f32 %v463, %v465
    %v468 = vmul.f32 %v463, 2.0
    %v469 = vsub.f32 %v468, 1.0
    %471 = vrot.lane.b32.xlu0 %v469, 126
    %v472 = vpop.permute.xlu0 %471
    %v474 = vmul.f32 %v463, %v472
    %476 = vrot.lane.b32.xlu0 %v474, 1
    %v477 = vpop.permute.xlu0 %476
    %v479 = vadd.f32 %v467, %v477
    %481 = vset.pattern.permute.xlu0 3
    %482 = vperm.xlu0 %481, %v463
    %v483 = vpop.permute.xlu0 %482
    %v485 = vmul.f32 %v483, %v262
    %v486 = vtanh.pop %v479
    %488 = vrot.lane.b32.xlu0 %v486, 2
    %v489 = vpop.permute.xlu0 %488
    %v491 = vmul.f32 %v463, %v489
    %492 = vset.pattern.permute.xlu0 1
    %493 = vperm.xlu0 %492, %v486
    %v494 = vpop.permute.xlu0 %493
    %v496 = vmul.f32 %v485, %v494
    %v498 = vrot.slane %v449, 7
    %v500 = vadd.f32 %v59, %v498
    %v501 = vxor.u32 %v500, 2147483648
    %v502 = vmul.f32 %v501, 1.442695
    %v503 = vpow.pop %v502
    %v504 = vadd.f32 %v503, 1.0
    %v505 = vrcp.pop %v504
    %v506 = vmul.f32 1.0, %v505
    %v508 = vrot.slane %v433, 7
    %v510 = vmul.f32 %v506, %v508
    %v511 = vmul.f32 %v506, 2.0
    %v512 = vsub.f32 %v511, 1.0
    %514 = vrot.lane.b32.xlu0 %v512, 126
    %v515 = vpop.permute.xlu0 %514
    %v517 = vmul.f32 %v506, %v515
    %519 = vrot.lane.b32.xlu0 %v517, 1
    %v520 = vpop.permute.xlu0 %519
    %v522 = vadd.f32 %v510, %v520
    %524 = vset.pattern.permute.xlu0 3
    %525 = vperm.xlu0 %524, %v506
    %v526 = vpop.permute.xlu0 %525
    %v528 = vmul.f32 %v526, %v440
    %v529 = vmul.f32 %v526, %v13
    %v530 = vtanh.pop %v522
    %532 = vset.pattern.permute.xlu0 1
    %533 = vperm.xlu0 %532, %v530
    %v534 = vpop.permute.xlu0 %533
    %v536 = vmul.f32 %v528, %v534
    %v537 = vmul.f32 %v529, %v534
    %v538 = vrot.slane %v14, 4
    %v540 = vadd.f32 %v537, %v538
    %v542 = vrot.slane %v496, 7
    %v544 = vadd.f32 %v540, %v542
    %v545 = vxor.u32 %v544, 2147483648
    %v546 = vmul.f32 %v545, 1.442695
    %v547 = vpow.pop %v546
    %v548 = vadd.f32 %v547, 1.0
    %v549 = vrcp.pop %v548
    %v550 = vmul.f32 1.0, %v549
    %v552 = vrot.slane %v479, 7
    %v554 = vmul.f32 %v550, %v552
    %v555 = vmul.f32 %v550, 2.0
    %v556 = vsub.f32 %v555, 1.0
    %558 = vrot.lane.b32.xlu0 %v556, 126
    %v559 = vpop.permute.xlu0 %558
    %v561 = vmul.f32 %v550, %v559
    %563 = vrot.lane.b32.xlu0 %v561, 1
    %v564 = vpop.permute.xlu0 %563
    %v566 = vadd.f32 %v554, %v564
    %568 = vset.pattern.permute.xlu0 3
    %569 = vperm.xlu0 %568, %v550
    %v570 = vpop.permute.xlu0 %569
    %v572 = vmul.f32 %v570, %v351
    %v573 = vtanh.pop %v566
    %575 = vrot.lane.b32.xlu0 %v573, 2
    %v576 = vpop.permute.xlu0 %575
    %v578 = vmul.f32 %v550, %v576
    %579 = vset.pattern.permute.xlu0 1
    %580 = vperm.xlu0 %579, %v573
    %v581 = vpop.permute.xlu0 %580
    %v583 = vmul.f32 %v572, %v581
    %v585 = vrot.slane %v536, 7
    %v587 = vadd.f32 %v59, %v585
    %v588 = vxor.u32 %v587, 2147483648
    %v589 = vmul.f32 %v588, 1.442695
    %v590 = vpow.pop %v589
    %v591 = vadd.f32 %v590, 1.0
    %v592 = vrcp.pop %v591
    %v593 = vmul.f32 1.0, %v592
    %v595 = vrot.slane %v522, 7
    %v597 = vmul.f32 %v593, %v595
    %v598 = vmul.f32 %v593, 2.0
    %v599 = vsub.f32 %v598, 1.0
    %601 = vrot.lane.b32.xlu0 %v599, 126
    %v602 = vpop.permute.xlu0 %601
    %v604 = vmul.f32 %v593, %v602
    %606 = vrot.lane.b32.xlu0 %v604, 1
    %v607 = vpop.permute.xlu0 %606
    %v609 = vadd.f32 %v597, %v607
    %611 = vset.pattern.permute.xlu0 3
    %612 = vperm.xlu0 %611, %v593
    %v613 = vpop.permute.xlu0 %612
    %v615 = vmul.f32 %v613, %v13
    %v616 = vmul.f32 %v613, %v129
    %v617 = vtanh.pop %v609
    %619 = vset.pattern.permute.xlu0 1
    %620 = vperm.xlu0 %619, %v617
    %v621 = vpop.permute.xlu0 %620
    %v623 = vmul.f32 %v615, %v621
    %v624 = vmul.f32 %v616, %v621
    %v625 = vrot.slane %v14, 3
    %v627 = vadd.f32 %v624, %v625
    %v629 = vrot.slane %v583, 7
    %v631 = vadd.f32 %v627, %v629
    %v632 = vxor.u32 %v631, 2147483648
    %v633 = vmul.f32 %v632, 1.442695
    %v634 = vpow.pop %v633
    %v635 = vadd.f32 %v634, 1.0
    %v636 = vrcp.pop %v635
    %v637 = vmul.f32 1.0, %v636
    %v639 = vrot.slane %v566, 7
    %v641 = vmul.f32 %v637, %v639
    %v642 = vmul.f32 %v637, 2.0
    %v643 = vsub.f32 %v642, 1.0
    %645 = vrot.lane.b32.xlu0 %v643, 126
    %v646 = vpop.permute.xlu0 %645
    %v648 = vmul.f32 %v637, %v646
    %650 = vrot.lane.b32.xlu0 %v648, 1
    %v651 = vpop.permute.xlu0 %650
    %v653 = vadd.f32 %v641, %v651
    %655 = vset.pattern.permute.xlu0 3
    %656 = vperm.xlu0 %655, %v637
    %v657 = vpop.permute.xlu0 %656
    %v659 = vmul.f32 %v657, %v440
    %v660 = vtanh.pop %v653
    %662 = vrot.lane.b32.xlu0 %v660, 2
    %v663 = vpop.permute.xlu0 %662
    %v665 = vmul.f32 %v637, %v663
    %666 = vset.pattern.permute.xlu0 1
    %667 = vperm.xlu0 %666, %v660
    %v668 = vpop.permute.xlu0 %667
    %v670 = vmul.f32 %v659, %v668
    %v672 = vrot.slane %v623, 7
    %v674 = vadd.f32 %v59, %v672
    %v675 = vxor.u32 %v674, 2147483648
    %v676 = vmul.f32 %v675, 1.442695
    %v677 = vpow.pop %v676
    %v678 = vadd.f32 %v677, 1.0
    %v679 = vrcp.pop %v678
    %v680 = vmul.f32 1.0, %v679
    %v682 = vrot.slane %v609, 7
    %v684 = vmul.f32 %v680, %v682
    %v685 = vmul.f32 %v680, 2.0
    %v686 = vsub.f32 %v685, 1.0
    %688 = vrot.lane.b32.xlu0 %v686, 126
    %v689 = vpop.permute.xlu0 %688
    %v691 = vmul.f32 %v680, %v689
    %693 = vrot.lane.b32.xlu0 %v691, 1
    %v694 = vpop.permute.xlu0 %693
    %v696 = vadd.f32 %v684, %v694
    %698 = vset.pattern.permute.xlu0 3
    %699 = vperm.xlu0 %698, %v680
    %v700 = vpop.permute.xlu0 %699
    %v702 = vmul.f32 %v700, %v86
    %v703 = vtanh.pop %v696
    %705 = vrot.lane.b32.xlu0 %v703, 2
    %v706 = vpop.permute.xlu0 %705
    %v708 = vmul.f32 %v680, %v706
    %709 = vset.pattern.permute.xlu0 1
    %710 = vperm.xlu0 %709, %v703
    %v711 = vpop.permute.xlu0 %710
    %v713 = vmul.f32 %v702, %v711
    %v714 = vrot.slane %v14, 2
    %v716 = vadd.f32 %v713, %v714
    %v718 = vrot.slane %v670, 7
    %v720 = vadd.f32 %v716, %v718
    %v721 = vxor.u32 %v720, 2147483648
    %v722 = vmul.f32 %v721, 1.442695
    %v723 = vpow.pop %v722
    %v724 = vadd.f32 %v723, 1.0
    %v725 = vrcp.pop %v724
    %v726 = vmul.f32 1.0, %v725
    %v728 = vrot.slane %v653, 7
    %v730 = vmul.f32 %v726, %v728
    %v731 = vmul.f32 %v726, 2.0
    %v732 = vsub.f32 %v731, 1.0
    %734 = vrot.lane.b32.xlu0 %v732, 126
    %v735 = vpop.permute.xlu0 %734
    %v737 = vmul.f32 %v726, %v735
    %739 = vrot.lane.b32.xlu0 %v737, 1
    %v740 = vpop.permute.xlu0 %739
    %v742 = vadd.f32 %v730, %v740
    %v743 = vtanh.pop %v742
    %745 = vrot.lane.b32.xlu0 %v743, 2
    %v746 = vpop.permute.xlu0 %745
    %v748 = vmul.f32 %v726, %v746
    %v749 = vlaneseq
    %v750 = vand.u32 %v749, 127
    %vm751 = vcmp.eq.s32.totalorder %v750, 0
    %753 = vset.pattern.permute.xlu0 3
    %754 = vperm.xlu0 %753, %v137
    %v755 = vpop.permute.xlu0 %754
    %v757 = vsel %vm751, %v755, 0.0
    %vm758 = vcmp.eq.s32.totalorder %v750, 1
    %760 = vset.pattern.permute.xlu0 3
    %761 = vperm.xlu0 %760, %v224
    %v762 = vpop.permute.xlu0 %761
    %v765 = vrot.slane %v757, 7
    %v767 = vsel %vm758, %v762, %v765
    %vm768 = vcmp.eq.s32.totalorder %v750, 2
    %770 = vset.pattern.permute.xlu0 3
    %771 = vperm.xlu0 %770, %v313
    %v772 = vpop.permute.xlu0 %771
    %v775 = vrot.slane %v767, 7
    %v777 = vsel %vm768, %v772, %v775
    %vm778 = vcmp.eq.s32.totalorder %v750, 3
    %780 = vset.pattern.permute.xlu0 3
    %781 = vperm.xlu0 %780, %v402
    %v782 = vpop.permute.xlu0 %781
    %v785 = vrot.slane %v777, 7
    %v787 = vsel %vm778, %v782, %v785
    %vm788 = vcmp.eq.s32.totalorder %v750, 4
    %790 = vset.pattern.permute.xlu0 3
    %791 = vperm.xlu0 %790, %v491
    %v792 = vpop.permute.xlu0 %791
    %v795 = vrot.slane %v787, 7
    %v797 = vsel %vm788, %v792, %v795
    %vm798 = vcmp.eq.s32.totalorder %v750, 5
    %800 = vset.pattern.permute.xlu0 3
    %801 = vperm.xlu0 %800, %v578
    %v802 = vpop.permute.xlu0 %801
    %v805 = vrot.slane %v797, 7
    %v807 = vsel %vm798, %v802, %v805
    %vm808 = vcmp.eq.s32.totalorder %v750, 6
    %810 = vset.pattern.permute.xlu0 3
    %811 = vperm.xlu0 %810, %v665
    %v812 = vpop.permute.xlu0 %811
    %v815 = vrot.slane %v807, 7
    %v817 = vsel %vm808, %v812, %v815
    %vm818 = vcmp.eq.s32.totalorder %v750, 7
    %820 = vset.pattern.permute.xlu0 3
    %821 = vperm.xlu0 %820, %v748
    %v822 = vpop.permute.xlu0 %821
    %v825 = vrot.slane %v817, 7
    %v827 = vsel %vm818, %v822, %v825
    %vm828 = vcmp.eq.s32.totalorder %v750, 8
    %830 = vset.pattern.permute.xlu0 3
    %831 = vperm.xlu0 %830, %v708
    %v832 = vpop.permute.xlu0 %831
    %v834 = vsel %vm828, %v832, %v827
    %vm835 = vcmp.eq.s32.totalorder %v750, 10
    %837 = vset.pattern.permute.xlu0 1
    %838 = vperm.xlu0 %837, %v696
    %v839 = vpop.permute.xlu0 %838
    %v841 = vsel %vm835, %v839, %v834
    %vm842 = vcmp.eq.s32.totalorder %v750, 9
    %v843 = vsel %vm842, %v822, %v841
    %vm844 = vcmp.eq.s32.totalorder %v750, 11
    %846 = vset.pattern.permute.xlu0 1
    %847 = vperm.xlu0 %846, %v742
    %v848 = vpop.permute.xlu0 %847
    %v850 = vsel %vm844, %v848, %v843
    %vm851 = vcmask 97287
    %852 = vst.msk [vmem:[#allocation2 - $0x7] sm:$0x80] %vm851, %v850
    // Predicated region
    $region10: #{tpu_custom_call.1} parent=1 // pred_check
      _
    $region11: #{tpu_custom_call.1} parent=1 // pred_check_branch
      %854 = sbr.rel (0) target = $region13
    $region12: #{tpu_custom_call.1} parent=1 // pred_region
      %s856 = ssub.s32 16, 16
      %857 = vsyncadd [#allocation3], %s856
      %s859 = sshll.u32 [#allocation2], 4
      %s860 = int_to_ptr.vmem [resolvable:$true] %s859
      %862 = dma.vmem_to_hbm [thread:$0]  %s860, 16, %s2, [#allocation3]
    $region13: #{tpu_custom_call.1} parent=1 // pred_fallthru
      _
    // Predicated region
    $region14: #{tpu_custom_call.1} parent=1 // pred_check
      _
    $region15: #{tpu_custom_call.1} parent=1 // pred_check_branch
      %864 = sbr.rel (0) target = $region17
    $region16: #{tpu_custom_call.1} parent=1 // pred_region
      %865 = dma.done [#allocation3], 16
    $region17: #{tpu_custom_call.1} parent=1 // pred_fallthru
      _
    %866 = vsyncpa [#allocation3], 1

</llo_original>
